<compile_context>
chip_gen: v7x
topology: tpu7x:2x2x1
jax: 0.10.0
libtpu: 0.0.40
codegen_flags: <defaults>
</compile_context>

<pallas_src>
import jax
import jax.numpy as jnp
from jax.experimental import pallas as pl
from jax.experimental.pallas import tpu as pltpu

_LANES = 128


def _round_up(x, m):
    return (x + m - 1) // m * m


def make_fused_table(emb_table, weight, bias, *, table_dtype=jnp.float32):
    """One-time init fold: (A,E) @ (E,H) + (H,) -> (A_pad, H).

    emb_table: (num_actions, embed_dim) f32
    weight:    (hidden_dim, embed_dim)  f32  (torch nn.Linear layout)
    bias:      (hidden_dim,)            f32
    A is padded to a multiple of 128 (zero rows) so the in-kernel one-hot
    contraction dim is lane-aligned for the MXU.  Padded rows are never
    selected by valid ids.
    """
    num_actions = emb_table.shape[0]
    a_pad = _round_up(num_actions, _LANES)
    fused = jnp.dot(emb_table, weight.T,
                    precision=jax.lax.Precision.HIGHEST) + bias[None, :]
    if a_pad != num_actions:
        fused = jnp.pad(fused, ((0, a_pad - num_actions), (0, 0)))
    return fused.astype(table_dtype)  # (A_pad, H)


def _encode_tile_kernel(acts_ref, table_ref, out_ref):
    # acts_ref:  (TB, 1)    int32 action ids for this batch tile
    # table_ref: (A_pad, H) fused table, VMEM-resident across all grid steps
    # out_ref:   (TB, H)    output tile
    tb = out_ref.shape[0]
    a_pad = table_ref.shape[0]
    acts = acts_ref[...]                                           # (TB, 1)
    onehot = (acts == jax.lax.broadcasted_iota(jnp.int32, (tb, a_pad), 1)
              ).astype(table_ref.dtype)                            # (TB, A_pad)
    out_ref[...] = jnp.dot(
        onehot, table_ref[...], preferred_element_type=jnp.float32
    ).astype(out_ref.dtype)


def action_encoder_discrete(actions, fused_table, *, block_b=512):
    """Forward pass: out[..., :] = fused_table[actions[...]] (shape ... x H)."""
    orig_shape = actions.shape
    acts = actions.reshape(-1).astype(jnp.int32)
    b = acts.shape[0]
    a_pad, h = fused_table.shape

    # Batch tile: at most block_b rows per grid step, multiple of 8 sublanes.
    tb = min(block_b, _round_up(b, 8))
    b_pad = _round_up(b, tb)
    if b_pad != b:
        acts = jnp.pad(acts, (0, b_pad - b))  # pad with id 0; rows dropped below
    acts2d = acts.reshape(b_pad, 1)

    grid = (b_pad // tb,)

    # Explicit VMEM budget: resident table + double-buffered acts/out tiles.
    itemsize = jnp.dtype(fused_table.dtype).itemsize
    vmem_need = (a_pad * h * itemsize          # resident fused table
                 + 2 * tb * 4                  # double-buffered action-id tiles
                 + 2 * tb * h * itemsize)      # double-buffered output tiles
    vmem_limit = int(min(64 * 1024 * 1024, max(32 * 1024 * 1024, 2 * vmem_need)))

    out = pl.pallas_call(
        _encode_tile_kernel,
        out_shape=jax.ShapeDtypeStruct((b_pad, h), fused_table.dtype),
        grid_spec=pltpu.PrefetchScalarGridSpec(
            num_scalar_prefetch=0,
            grid=grid,
            in_specs=[
                pl.BlockSpec((tb, 1), lambda i: (i, 0)),      # action ids tile
                pl.BlockSpec((a_pad, h), lambda i: (0, 0)),   # table (resident)
            ],
            out_specs=pl.BlockSpec((tb, h), lambda i: (i, 0)),
        ),
        compiler_params=pltpu.CompilerParams(
            dimension_semantics=("parallel",),
            vmem_limit_bytes=vmem_limit,
        ),
    )(acts2d, fused_table)

    if b_pad != b:
        out = out[:b]
    return out.reshape(*orig_shape, h)


if __name__ == "__main__":
    # Small shapes consistent with the module.
    num_actions = 16
    embed_dim = 32
    hidden_dim = 32
    batch = 8

    key = jax.random.PRNGKey(0)
    k_emb, k_w, k_b, k_act = jax.random.split(key, 4)

    # Init-style parameters (torch: Embedding ~ N(0,1),
    # Linear ~ U(-1/sqrt(fan_in), 1/sqrt(fan_in))).
    emb_table = jax.random.normal(k_emb, (num_actions, embed_dim), dtype=jnp.float32)
    bound = 1.0 / (embed_dim ** 0.5)
    weight = jax.random.uniform(k_w, (hidden_dim, embed_dim),
                                minval=-bound, maxval=bound, dtype=jnp.float32)
    bias = jax.random.uniform(k_b, (hidden_dim,),
                              minval=-bound, maxval=bound, dtype=jnp.float32)
    actions = jax.random.randint(k_act, (batch,), 0, num_actions, dtype=jnp.int32)

    # One-time parameter fold (init-time; not on the per-call hot path).
    fused_table = jax.block_until_ready(make_fused_table(emb_table, weight, bias))

    out = action_encoder_discrete(actions, fused_table)
    out = jax.block_until_ready(out)

    # Pure-JAX reference (embedding gather + linear), f32.
    ref = jnp.dot(emb_table[actions], weight.T,
                  precision=jax.lax.Precision.HIGHEST) + bias

    assert out.shape == (batch, hidden_dim)
    assert jnp.allclose(out, ref, atol=1e-4, rtol=1e-4), \
        float(jnp.max(jnp.abs(out - ref)))

    print("KERNEL_OK")
</pallas_src>

<mosaic_0001>
module attributes {stable_mosaic.version = 11 : i64} {
  func.func @_encode_tile_kernel(%arg0: i32, %arg1: memref<8x1xi32, #tpu.memory_space<vmem>>, %arg2: memref<128x32xf32, #tpu.memory_space<vmem>>, %arg3: memref<8x32xf32, #tpu.memory_space<vmem>>) attributes {dimension_semantics = [#tpu.dimension_semantics<parallel>], iteration_bounds = array<i64: 1>, scalar_prefetch = 0 : i64, scratch_operands = 0 : i64, tpu.core_type = #tpu.core_type<tc>, window_params = [{transform_indices = @transform_0, window_bounds = array<i64: 8, 1>}, {pipeline_mode = #tpu.pipeline_mode<synchronous>, transform_indices = @transform_1, window_bounds = array<i64: 128, 32>}, {transform_indices = @transform_2, window_bounds = array<i64: 8, 32>}]} {
    %c0 = arith.constant 0 : index
    %c0_0 = arith.constant 0 : index
    %0 = vector.load %arg1[%c0, %c0_0] : memref<8x1xi32, #tpu.memory_space<vmem>>, vector<8x1xi32>
    %1 = tpu.iota {dimensions = array<i32: 1>} : vector<8x128xi32>
    %2 = vector.broadcast %0 : vector<8x1xi32> to vector<8x128xi32>
    %3 = arith.cmpi eq, %2, %1 : vector<8x128xi32>
    %4 = arith.extui %3 : vector<8x128xi1> to vector<8x128xi32>
    %5 = arith.sitofp %4 : vector<8x128xi32> to vector<8x128xf32>
    %c0_1 = arith.constant 0 : index
    %c0_2 = arith.constant 0 : index
    %6 = vector.load %arg2[%c0_1, %c0_2] : memref<128x32xf32, #tpu.memory_space<vmem>>, vector<128x32xf32>
    %cst = arith.constant dense<0.000000e+00> : vector<8x32xf32>
    %7 = tpu.matmul %5, %6, %cst {dimension_numbers = #tpu.dot_dimension_numbers<[1], [0], [0], [1], [0, 0, 1, 1], [], []>} : vector<8x128xf32>, vector<128x32xf32>, vector<8x32xf32> -> vector<8x32xf32>
    %c0_3 = arith.constant 0 : index
    %c0_4 = arith.constant 0 : index
    %8 = vector.load %arg3[%c0_3, %c0_4] : memref<8x32xf32, #tpu.memory_space<vmem>>, vector<8x32xf32>
    tpu.vector_store %arg3[%c0_3, %c0_4], %7 {strides = array<i32>} : memref<8x32xf32, #tpu.memory_space<vmem>>, vector<8x32xf32>,
    return
  }
  func.func @transform_0(%arg0: i32) -> (i32, i32) {
    %c0_i32 = arith.constant 0 : i32
    %c0_i32_0 = arith.constant 0 : i32
    return %arg0, %c0_i32 : i32, i32
  }
  func.func @transform_1(%arg0: i32) -> (i32, i32) {
    %c0_i32 = arith.constant 0 : i32
    %c0_i32_0 = arith.constant 0 : i32
    %c0_i32_1 = arith.constant 0 : i32
    return %c0_i32, %c0_i32_0 : i32, i32
  }
  func.func @transform_2(%arg0: i32) -> (i32, i32) {
    %c0_i32 = arith.constant 0 : i32
    %c0_i32_0 = arith.constant 0 : i32
    return %arg0, %c0_i32 : i32, i32
  }
}

</mosaic_0001>

<llo_original>
// kernel: tpu_custom_call.1
$region0: #{tpu_custom_call.1}
  #allocation0 [shape = 'u32[]', space=smem, size = 0x4, offset = 0x4, fixed_abs, tag = 'smem constant byte address 0x4 - core index']
  #allocation1 [shape = 'u32[144,128]{1,0:T(1,128)}', space=vmem, size = 0x12000, scoped, tag = 'internal scratch']
  %s0 = inlined_call_operand.vmem [shape: s32[8,1], index: 0, kind: input, shape index: {}]
  %s1 = inlined_call_operand.vmem [shape: f32[128,32], index: 1, kind: input, shape index: {}]
  %s2 = inlined_call_operand.hbm [shape: f32[8,32], index: 2, kind: output, shape index: {}]
  %s3 = sld [smem:[#allocation0]]
  $region18: #{tpu_custom_call.1} parent=0
    _
  %s5 = ssub.s32 1, %s3
  %s6 = scalar_select 0, %s5, %s3
  $region1: #{tpu_custom_call.1} parent=0
    #allocation2 [shape = 'u8[4096]{0}', space=vmem, size = 0x1000, scoped, tag = 'output window, operand 0, single buffered']
    #allocation3 [shape = 's32[1]{0}', space=sflag, size = 0x4, scoped, tag = 'scoped memory for tpu_custom_call.1']
    %7 = vsyncpa [#allocation3], 0
    // Predicated region
    $region2: #{tpu_custom_call.1} parent=1 // pred_check
      _
    $region3: #{tpu_custom_call.1} parent=1 // pred_check_branch
      %9 = sbr.rel (0) target = $region5
    $region4: #{tpu_custom_call.1} parent=1 // pred_region
      _
    $region5: #{tpu_custom_call.1} parent=1 // pred_fallthru
      _
    // Predicated region
    $region6: #{tpu_custom_call.1} parent=1 // pred_check
      _
    $region7: #{tpu_custom_call.1} parent=1 // pred_check_branch
      %11 = sbr.rel (0) target = $region9
    $region8: #{tpu_custom_call.1} parent=1 // pred_region
      _
    $region9: #{tpu_custom_call.1} parent=1 // pred_fallthru
      _
    %v12 = vld [vmem:[%s0] sm:$0xff]
    %v13 = vlaneseq
    %v14 = vand.u32 %v13, 127
    %15 = vset.pattern.permute.xlu0 0
    %16 = vperm.xlu0 %15, %v12
    %v17 = vpop.permute.xlu0 %16
    %vm18 = vcmp.eq.s32.totalorder %v17, %v14
    %v19 = vsel %vm18, 1, 0
    %v20 = vcvt.s32.f32 %v19
    %v21 = vld [vmem:[%s1] sm:$0xff]
    %v22 = vld [vmem:[%s1 + $0x8] sm:$0xff]
    %v23 = vld [vmem:[%s1 + $0x10] sm:$0xff]
    %v24 = vld [vmem:[%s1 + $0x18] sm:$0xff]
    %v25 = vld [vmem:[%s1 + $0x20] sm:$0xff]
    %v26 = vld [vmem:[%s1 + $0x28] sm:$0xff]
    %v27 = vld [vmem:[%s1 + $0x30] sm:$0xff]
    %v28 = vld [vmem:[%s1 + $0x38] sm:$0xff]
    %v29 = vld [vmem:[%s1 + $0x40] sm:$0xff]
    %v30 = vld [vmem:[%s1 + $0x48] sm:$0xff]
    %v31 = vld [vmem:[%s1 + $0x50] sm:$0xff]
    %v32 = vld [vmem:[%s1 + $0x58] sm:$0xff]
    %v33 = vld [vmem:[%s1 + $0x60] sm:$0xff]
    %v34 = vld [vmem:[%s1 + $0x68] sm:$0xff]
    %v35 = vld [vmem:[%s1 + $0x70] sm:$0xff]
    %v36 = vld [vmem:[%s1 + $0x78] sm:$0xff]
    %37 = vmatprep.subr.mxu0 0.0
    %38 = vmatpush1.msra.mxu0 %v21
    %39 = vmatprep.subr.mxu0 0.0
    %40 = vmatpush1.msra.mxu0 %v22
    %41 = vmatprep.subr.mxu0 0.0
    %42 = vmatpush1.msra.mxu0 %v23
    %43 = vmatprep.subr.mxu0 0.0
    %44 = vmatpush1.msra.mxu0 %v24
    %45 = vmatprep.subr.mxu0 0.0
    %46 = vmatpush1.msra.mxu0 %v25
    %47 = vmatprep.subr.mxu0 0.0
    %48 = vmatpush1.msra.mxu0 %v26
    %49 = vmatprep.subr.mxu0 0.0
    %50 = vmatpush1.msra.mxu0 %v27
    %51 = vmatprep.subr.mxu0 0.0
    %52 = vmatpush1.msra.mxu0 %v28
    %53 = vmatprep.subr.mxu0 0.0
    %54 = vmatpush1.msra.mxu0 %v29
    %55 = vmatprep.subr.mxu0 0.0
    %56 = vmatpush1.msra.mxu0 %v30
    %57 = vmatprep.subr.mxu0 0.0
    %58 = vmatpush1.msra.mxu0 %v31
    %59 = vmatprep.subr.mxu0 0.0
    %60 = vmatpush1.msra.mxu0 %v32
    %61 = vmatprep.subr.mxu0 0.0
    %62 = vmatpush1.msra.mxu0 %v33
    %63 = vmatprep.subr.mxu0 0.0
    %64 = vmatpush1.msra.mxu0 %v34
    %65 = vmatprep.subr.mxu0 0.0
    %66 = vmatpush1.msra.mxu0 %v35
    %67 = vmatprep.subr.mxu0 0.0
    %68 = vmatpush1.msra.mxu0 %v36
    %69 = vmatprep.subr.mxu0 0.0
    %70 = vmatpush1.msra.mxu0 0.0
    %71 = vmatprep.subr.mxu0 0.0
    %72 = vmatpush1.msra.mxu0 0.0
    %73 = vmatprep.subr.mxu0 0.0
    %74 = vmatpush1.msra.mxu0 0.0
    %75 = vmatprep.subr.mxu0 0.0
    %76 = vmatpush1.msra.mxu0 0.0
    %77 = vmatprep.subr.mxu0 0.0
    %78 = vmatpush1.msra.mxu0 0.0
    %79 = vmatprep.subr.mxu0 0.0
    %80 = vmatpush1.msra.mxu0 0.0
    %81 = vmatprep.subr.mxu0 0.0
    %82 = vmatpush1.msra.mxu0 0.0
    %83 = vmatprep.subr.mxu0 0.0
    %84 = vmatpush1.msra.mxu0 0.0
    %85 = vmatprep.subr.mxu0 0.0
    %86 = vmatpush1.msra.mxu0 0.0
    %87 = vmatprep.subr.mxu0 0.0
    %88 = vmatpush1.msra.mxu0 0.0
    %89 = vmatprep.subr.mxu0 0.0
    %90 = vmatpush1.msra.mxu0 0.0
    %91 = vmatprep.subr.mxu0 0.0
    %92 = vmatpush1.msra.mxu0 0.0
    %93 = vmatprep.subr.mxu0 0.0
    %94 = vmatpush1.msra.mxu0 0.0
    %95 = vmatprep.subr.mxu0 0.0
    %96 = vmatpush1.msra.mxu0 0.0
    %97 = vmatprep.subr.mxu0 0.0
    %98 = vmatpush1.msra.mxu0 0.0
    %99 = vmatprep.subr.mxu0 0.0
    %100 = vmatpush1.msra.mxu0 0.0
    %101 = vmatprep.mubr.f32.mxu0 0.0
    %102 = vmatmul.mubr.f32.gmra.mrb[0].mxu0 %v20
    %v103 = vpop.f32.mrb[0].mxu0
    %v104 = vadd.f32 0.0, %v103
    %v105 = vpop.f32.mrb[0].mxu0
    %106 = vdwg.mxu0
    %vm107 = vcmask 261120
    %108 = vst.msk [vmem:[#allocation2] sm:$0xff] %vm107, %v104
    // Predicated region
    $region10: #{tpu_custom_call.1} parent=1 // pred_check
      _
    $region11: #{tpu_custom_call.1} parent=1 // pred_check_branch
      %110 = sbr.rel (0) target = $region13
    $region12: #{tpu_custom_call.1} parent=1 // pred_region
      %s112 = ssub.s32 128, 128
      %113 = vsyncadd [#allocation3], %s112
      %s115 = sshll.u32 [#allocation2], 4
      %s116 = int_to_ptr.vmem [resolvable:$true] %s115
      %118 = dma.vmem_to_hbm [thread:$0]  %s116, 128, %s2, [#allocation3]
    $region13: #{tpu_custom_call.1} parent=1 // pred_fallthru
      _
    // Predicated region
    $region14: #{tpu_custom_call.1} parent=1 // pred_check
      _
    $region15: #{tpu_custom_call.1} parent=1 // pred_check_branch
      %120 = sbr.rel (0) target = $region17
    $region16: #{tpu_custom_call.1} parent=1 // pred_region
      %121 = dma.done [#allocation3], 128
    $region17: #{tpu_custom_call.1} parent=1 // pred_fallthru
      _
    %122 = vsyncpa [#allocation3], 1

</llo_original>
